<compile_context>
chip_gen: v7x
topology: tpu7x:2x2x1
jax: 0.10.0
libtpu: 0.0.40
codegen_flags: <defaults>
</compile_context>

<pallas_src>
import jax
import jax.numpy as jnp
from jax.experimental import pallas as pl
from jax.experimental.pallas import tpu as pltpu


# ---------------------------------------------------------------------------
# Tile-size selection (VMEM-budget driven, safe on v5e / v6e / v7x)
# ---------------------------------------------------------------------------
_TILE_BUDGET_BYTES = 6 * 1024 * 1024   # per x-tile; ~4x (dbl-buffered in+out) ≈ 24 MiB VMEM
_MAX_ROW_TILE = 1024                   # rows (sublane axis); multiple of 8
_MAX_LANE_TILE = 4096                  # lanes; multiple of 128


def _choose_row_tile(n_rows, row_bytes):
    """Largest row tile that is a multiple of 8 (or the full extent) within budget."""
    fit = max(1, _TILE_BUDGET_BYTES // max(1, row_bytes))
    t = min(n_rows, _MAX_ROW_TILE, fit)
    if t >= n_rows:
        return n_rows                  # full extent: always a legal block dim
    return max(8, (t // 8) * 8)        # multiple of 8; tail block is masked by Pallas


def _choose_lane_tile(n_lanes):
    """Full extent if small, else a multiple-of-128 lane tile."""
    if n_lanes <= _MAX_LANE_TILE:
        return n_lanes                 # full extent: always a legal block dim
    return _MAX_LANE_TILE              # multiple of 128 -> unmasked vst


# ---------------------------------------------------------------------------
# Kernels
# ---------------------------------------------------------------------------
def _add_bias_rows_kernel(x_ref, b_ref, o_ref):
    # x_ref: (TN, C), b_ref: (1, C) -> broadcast over rows (sublanes)
    o_ref[...] = x_ref[...] + b_ref[...]


def _add_bias_cols_kernel(x_ref, b_ref, o_ref):
    # x_ref: (TR, THW), b_ref: (TR, 1) -> broadcast over the lane (spatial) axis
    o_ref[...] = x_ref[...] + b_ref[...]


# ---------------------------------------------------------------------------
# Wrappers
# ---------------------------------------------------------------------------
def add_bias_2d(x, bias_c1):
    """x: (N, C), bias_c1: (C, 1) parameter (as stored by the module)."""
    n, c = x.shape
    bias_row = bias_c1.reshape(1, c).astype(x.dtype)   # == bias.t().view(1, -1)

    tn = _choose_row_tile(n, c * x.dtype.itemsize)
    grid = (pl.cdiv(n, tn),)

    return pl.pallas_call(
        _add_bias_rows_kernel,
        out_shape=jax.ShapeDtypeStruct((n, c), x.dtype),
        grid=grid,
        in_specs=[
            pl.BlockSpec((tn, c), lambda i: (i, 0)),
            pl.BlockSpec((1, c), lambda i: (0, 0)),
        ],
        out_specs=pl.BlockSpec((tn, c), lambda i: (i, 0)),
        compiler_params=pltpu.CompilerParams(
            dimension_semantics=("parallel",),
        ),
    )(x, bias_row)


def add_bias_4d(x, bias_c1):
    """x: (N, C, H, W) NCHW, bias_c1: (C, 1) parameter."""
    n, c, h, w = x.shape
    hw = h * w
    r = n * c

    # Fold C into the row axis so the lane axis (H*W) is dense even for tiny C.
    x_flat = x.reshape(r, hw)                               # row r = n*C + c
    bias_rows = jnp.tile(bias_c1.astype(x.dtype), (n, 1))   # (N*C, 1); row n*C+c -> bias[c]

    thw = _choose_lane_tile(hw)
    tr = _choose_row_tile(r, thw * x.dtype.itemsize)
    grid = (pl.cdiv(r, tr), pl.cdiv(hw, thw))

    out_flat = pl.pallas_call(
        _add_bias_cols_kernel,
        out_shape=jax.ShapeDtypeStruct((r, hw), x.dtype),
        grid=grid,
        in_specs=[
            pl.BlockSpec((tr, thw), lambda i, j: (i, j)),
            pl.BlockSpec((tr, 1), lambda i, j: (i, 0)),
        ],
        out_specs=pl.BlockSpec((tr, thw), lambda i, j: (i, j)),
        compiler_params=pltpu.CompilerParams(
            dimension_semantics=("parallel", "parallel"),
        ),
    )(x_flat, bias_rows)

    return out_flat.reshape(n, c, h, w)


def add_bias(x, bias_c1):
    """Dispatch mirroring AddBias.forward."""
    if x.ndim == 2:
        return add_bias_2d(x, bias_c1)
    else:
        return add_bias_4d(x, bias_c1)


# ---------------------------------------------------------------------------
# Demo / self-check
# ---------------------------------------------------------------------------
if __name__ == "__main__":
    key = jax.random.PRNGKey(0)
    k_bias, k_x2d, k_x4d = jax.random.split(key, 3)

    # Deterministic parameter init: bias vector of length C, stored as (C, 1)
    # exactly like nn.Parameter(bias.unsqueeze(1)).
    C = 4
    bias_vec = jax.random.normal(k_bias, (C,), dtype=jnp.float32)
    bias_param = bias_vec[:, None]  # (C, 1)

    # --- 2-D path: x of shape (N, C) -------------------------------------
    N = 2
    x2d = jax.random.normal(k_x2d, (N, C), dtype=jnp.float32)
    out2d = jax.block_until_ready(add_bias(x2d, bias_param))
    ref2d = x2d + bias_vec[None, :]
    assert jnp.allclose(out2d, ref2d, atol=1e-6), "2D mismatch"

    # --- 4-D path: x of shape (N, C, H, W), NCHW --------------------------
    H = W = 16
    x4d = jax.random.normal(k_x4d, (N, C, H, W), dtype=jnp.float32)
    out4d = jax.block_until_ready(add_bias(x4d, bias_param))
    ref4d = x4d + bias_vec[None, :, None, None]
    assert jnp.allclose(out4d, ref4d, atol=1e-6), "4D mismatch"

    print("KERNEL_OK")
</pallas_src>

<mosaic_0001>
module attributes {stable_mosaic.version = 11 : i64} {
  func.func @_add_bias_rows_kernel(%arg0: i32, %arg1: memref<2x4xf32, #tpu.memory_space<vmem>>, %arg2: memref<1x4xf32, #tpu.memory_space<vmem>>, %arg3: memref<2x4xf32, #tpu.memory_space<vmem>>) attributes {dimension_semantics = [#tpu.dimension_semantics<parallel>], iteration_bounds = array<i64: 1>, scalar_prefetch = 0 : i64, scratch_operands = 0 : i64, tpu.core_type = #tpu.core_type<tc>, window_params = [{transform_indices = @transform_0, window_bounds = array<i64: 2, 4>}, {pipeline_mode = #tpu.pipeline_mode<synchronous>, transform_indices = @transform_1, window_bounds = array<i64: 1, 4>}, {transform_indices = @transform_2, window_bounds = array<i64: 2, 4>}]} {
    %c0 = arith.constant 0 : index
    %c0_0 = arith.constant 0 : index
    %0 = vector.load %arg1[%c0, %c0_0] : memref<2x4xf32, #tpu.memory_space<vmem>>, vector<2x4xf32>
    %c0_1 = arith.constant 0 : index
    %c0_2 = arith.constant 0 : index
    %1 = vector.load %arg2[%c0_1, %c0_2] : memref<1x4xf32, #tpu.memory_space<vmem>>, vector<1x4xf32>
    %2 = vector.broadcast %1 : vector<1x4xf32> to vector<2x4xf32>
    %3 = arith.addf %0, %2 : vector<2x4xf32>
    %c0_3 = arith.constant 0 : index
    %c0_4 = arith.constant 0 : index
    %4 = vector.load %arg3[%c0_3, %c0_4] : memref<2x4xf32, #tpu.memory_space<vmem>>, vector<2x4xf32>
    tpu.vector_store %arg3[%c0_3, %c0_4], %3 {strides = array<i32>} : memref<2x4xf32, #tpu.memory_space<vmem>>, vector<2x4xf32>,
    return
  }
  func.func @transform_0(%arg0: i32) -> (i32, i32) {
    %c0_i32 = arith.constant 0 : i32
    %c0_i32_0 = arith.constant 0 : i32
    return %arg0, %c0_i32 : i32, i32
  }
  func.func @transform_1(%arg0: i32) -> (i32, i32) {
    %c0_i32 = arith.constant 0 : i32
    %c0_i32_0 = arith.constant 0 : i32
    %c0_i32_1 = arith.constant 0 : i32
    return %c0_i32, %c0_i32_0 : i32, i32
  }
  func.func @transform_2(%arg0: i32) -> (i32, i32) {
    %c0_i32 = arith.constant 0 : i32
    %c0_i32_0 = arith.constant 0 : i32
    return %arg0, %c0_i32 : i32, i32
  }
}

</mosaic_0001>

<llo_original>
// kernel: tpu_custom_call.1
$region0: #{tpu_custom_call.1}
  #allocation0 [shape = 'u32[]', space=smem, size = 0x4, offset = 0x4, fixed_abs, tag = 'smem constant byte address 0x4 - core index']
  #allocation1 [shape = 'u32[144,128]{1,0:T(1,128)}', space=vmem, size = 0x12000, scoped, tag = 'internal scratch']
  %s0 = inlined_call_operand.hbm [shape: f32[2,4], index: 0, kind: input, shape index: {}]
  %s1 = inlined_call_operand.vmem [shape: f32[1,4], index: 1, kind: input, shape index: {}]
  %s2 = inlined_call_operand.hbm [shape: f32[2,4], index: 2, kind: output, shape index: {}]
  %s3 = sld [smem:[#allocation0]]
  $region22: #{tpu_custom_call.1} parent=0
    _
  %s5 = ssub.s32 1, %s3
  %s6 = scalar_select 0, %s5, %s3
  $region1: #{tpu_custom_call.1} parent=0
    #allocation2 [shape = 'u8[1024]{0}', space=vmem, size = 0x400, scoped, tag = 'input window, operand 0, single buffered']
    #allocation3 [shape = 's32[1]{0}', space=sflag, size = 0x4, scoped, tag = 'scoped memory for tpu_custom_call.1']
    #allocation4 [shape = 's32[1]{0}', space=sflag, size = 0x4, scoped, tag = 'scoped memory for tpu_custom_call.1']
    #allocation5 [shape = 'u8[1024]{0}', space=vmem, size = 0x400, scoped, tag = 'output window, operand 0, single buffered']
    %7 = vsyncpa [#allocation3], 0
    %8 = vsyncpa [#allocation4], 0
    // Predicated region
    $region2: #{tpu_custom_call.1} parent=1 // pred_check
      _
    $region3: #{tpu_custom_call.1} parent=1 // pred_check_branch
      %10 = sbr.rel (0) target = $region5
    $region4: #{tpu_custom_call.1} parent=1 // pred_region
      %s12 = ssub.s32 32, 32
      %13 = vsyncadd [#allocation3], %s12
      %s15 = sshll.u32 [#allocation2], 4
      %s16 = int_to_ptr.vmem [resolvable:$true] %s15
      %18 = dma.hbm_to_vmem [thread:$0]  %s0, 32, %s16, [#allocation3]
    $region5: #{tpu_custom_call.1} parent=1 // pred_fallthru
      _
    // Predicated region
    $region6: #{tpu_custom_call.1} parent=1 // pred_check
      _
    $region7: #{tpu_custom_call.1} parent=1 // pred_check_branch
      %20 = sbr.rel (0) target = $region9
    $region8: #{tpu_custom_call.1} parent=1 // pred_region
      _
    $region9: #{tpu_custom_call.1} parent=1 // pred_fallthru
      _
    // Predicated region
    $region10: #{tpu_custom_call.1} parent=1 // pred_check
      _
    $region11: #{tpu_custom_call.1} parent=1 // pred_check_branch
      %22 = sbr.rel (0) target = $region13
    $region12: #{tpu_custom_call.1} parent=1 // pred_region
      %23 = dma.done [#allocation3], 32
    $region13: #{tpu_custom_call.1} parent=1 // pred_fallthru
      _
    %v24 = vld [vmem:[#allocation2] sm:$0x3]
    %v25 = vld [vmem:[%s1] sm:$0x1]
    %v27 = vlaneseq
    %v28 = vshrl.u32 %v27, 7
    %v29 = vsub.s32 0, %v28
    %v30 = vrot.slane %v25, %v29
    %v32 = vadd.f32 %v24, %v30
    %vm33 = vcmask 25600
    %34 = vst.msk [vmem:[#allocation5] sm:$0x3] %vm33, %v32
    // Predicated region
    $region14: #{tpu_custom_call.1} parent=1 // pred_check
      _
    $region15: #{tpu_custom_call.1} parent=1 // pred_check_branch
      %36 = sbr.rel (0) target = $region17
    $region16: #{tpu_custom_call.1} parent=1 // pred_region
      %s38 = ssub.s32 32, 32
      %39 = vsyncadd [#allocation4], %s38
      %s41 = sshll.u32 [#allocation5], 4
      %s42 = int_to_ptr.vmem [resolvable:$true] %s41
      %44 = dma.vmem_to_hbm [thread:$0]  %s42, 32, %s2, [#allocation4]
    $region17: #{tpu_custom_call.1} parent=1 // pred_fallthru
      _
    // Predicated region
    $region18: #{tpu_custom_call.1} parent=1 // pred_check
      _
    $region19: #{tpu_custom_call.1} parent=1 // pred_check_branch
      %46 = sbr.rel (0) target = $region21
    $region20: #{tpu_custom_call.1} parent=1 // pred_region
      %47 = dma.done [#allocation4], 32
    $region21: #{tpu_custom_call.1} parent=1 // pred_fallthru
      _
    %48 = vsyncpa [#allocation3], 1
    %49 = vsyncpa [#allocation4], 1

</llo_original>
